<compile_context>
chip_gen: v5e
topology: v5e:2x2
jax: 0.10.0
libtpu: 0.0.40
codegen_flags: <defaults>
</compile_context>

<pallas_src>
import functools

import jax
import jax.numpy as jnp
from jax.experimental import pallas as pl
from jax.experimental.pallas import tpu as pltpu

_MIB = 1024 * 1024


def _cdiv(a, b):
    return -(-a // b)


def _round_up(x, m):
    return _cdiv(x, m) * m


def _prod(xs):
    p = 1
    for s in xs:
        p *= int(s)
    return p


def _tpu_generation_info():
    """(vmem_capacity_bytes, has_native_bf16_valu) — best-effort, safe fallbacks."""
    cap = None
    try:
        cap = int(pltpu.get_tpu_info().vmem_capacity_bytes)
    except Exception:
        cap = None
    kind = ""
    try:
        devs = jax.devices()
        if devs:
            kind = str(getattr(devs[0], "device_kind", "")).lower()
    except Exception:
        kind = ""
    if cap is None:
        # v4/v5e/v6e have 128 MiB of VMEM; assume the conservative 64 MiB otherwise.
        cap = 128 * _MIB if any(t in kind for t in ("v4", "v5", "v6")) else 64 * _MIB
    # bf16 VALU exists on v6e/v7x; stay on the f32-first path when unsure.
    bf16_native = bool(kind) and not any(t in kind for t in ("v2", "v3", "v4", "v5"))
    return cap, bf16_native


def _euclidean_dist_kernel(x1_ref, x2_ref, o_ref, *, compute_dtype):
    # x1_ref / x2_ref: (1, tm, D) streaming tiles and/or (1, 1, D) VMEM-resident
    # broadcast rows.  o_ref: (1, 1, sub_blocks, lanes) lane-dense output tile,
    # sub_blocks * lanes == tm.
    x1 = x1_ref[0]
    x2 = x2_ref[0]
    # Subtract in the narrow native dtype when the VPU supports it (v6e/v7x bf16);
    # square/accumulate always in f32.
    d = x1.astype(compute_dtype) - x2.astype(compute_dtype)
    df = d.astype(jnp.float32)
    sq = df * df
    _, _, sub_blocks, lanes = o_ref.shape
    dd = sq.shape[-1]
    if sq.shape[0] == sub_blocks * lanes:
        # Leading-dim split is a layout no-op; the reduce runs over the lane (D)
        # axis and the small relayout of the result rides the XLU, hidden behind
        # the streaming input DMA.
        r = jnp.sum(sq.reshape(sub_blocks, lanes, dd), axis=-1)
    else:
        # Both operands VMEM-resident (fully broadcast rows): one row of output.
        r = jnp.broadcast_to(jnp.sum(sq, axis=-1, keepdims=True), (sub_blocks, lanes))
    o_ref[0, 0] = (-r).astype(o_ref.dtype)


def _classify(x, bshape):
    """How x broadcasts against bshape: ('stream'|'row'|'outer'|'general', kb)."""
    rank = len(bshape)
    shape = (1,) * (rank - x.ndim) + tuple(int(s) for s in x.shape)
    if shape == tuple(int(s) for s in bshape):
        return "stream", 0
    L = rank - 1
    if shape[-1] != int(bshape[-1]):
        return "general", 0            # broadcast along the feature dim itself
    lead, blead = shape[:L], tuple(int(s) for s in bshape[:L])
    if all(s == 1 for s in lead):
        return "row", 0                # single (1, D) row, VMEM resident
    kb = L
    while kb > 0 and lead[kb - 1] == 1:
        kb -= 1
    if all(lead[j] == blead[j] for j in range(kb)):
        return "outer", kb             # constant within each outer group of rows
    return "general", 0


def euclidean_dist(x1, x2):
    """-((x1 - x2) ** 2).sum(-1), matching EuclideanDist with its default dim=-1."""
    x1 = jnp.asarray(x1)
    x2 = jnp.asarray(x2)
    out_dtype = jnp.result_type(x1.dtype, x2.dtype)
    bshape = tuple(int(s) for s in jnp.broadcast_shapes(x1.shape, x2.shape))
    D = bshape[-1]
    lead_shape = bshape[:-1]
    M = _prod(lead_shape)
    if M == 0 or D == 0:                              # degenerate: nothing to do
        return jnp.zeros(lead_shape, out_dtype)

    vmem_cap, bf16_native = _tpu_generation_info()
    # 48 MiB scoped limit on v7x (64 MiB physical), 64 MiB on v4/v5e/v6e (128 MiB).
    vmem_limit = max(32 * _MIB, min(64 * _MIB, vmem_cap - 16 * _MIB))
    # v7x's ~3.2 TB/s HBM wants bigger per-step DMAs vs the fixed ~0.35us/step tax.
    target_step_bytes = 24 * _MIB if vmem_cap < 100 * _MIB else 16 * _MIB

    if jnp.dtype(out_dtype) == jnp.dtype(jnp.bfloat16) and bf16_native:
        compute_dtype = jnp.bfloat16
    else:
        compute_dtype = jnp.float32

    # --- broadcast decomposition: rows = (outer groups) x (inner rows) ----------
    c1 = _classify(x1, bshape)
    c2 = _classify(x2, bshape)
    L = len(bshape) - 1
    k = max([kb for kind, kb in (c1, c2) if kind == "outer"], default=0)
    Mo = _prod(bshape[:k])
    Minner = _prod(bshape[k:L])
    if k > 0 and Mo > 8 and Minner < 128:
        # Many tiny outer groups: cheaper to materialize the broadcast operand
        # once than to run thousands of tiny grid steps.
        c1 = ("general", 0) if c1[0] == "outer" else c1
        c2 = ("general", 0) if c2[0] == "outer" else c2
        k, Mo, Minner = 0, 1, M
    # TODO(synk): 'inner'/mixed broadcast patterns (e.g. (1,S,D) vs (B,S,D)) still
    # fall back to a materializing jnp.broadcast_to.

    def _prep(x, kind, kb):
        if kind == "stream":
            return x.reshape(Mo, Minner, D), True, 1
        if kind == "general":
            return jnp.broadcast_to(x, bshape).reshape(Mo, Minner, D), True, 1
        mo_i = _prod(bshape[:kb])                 # 'row' has kb == 0 -> mo_i == 1
        rep = max(Mo // mo_i, 1)
        return x.reshape(mo_i, 1, D), False, rep

    x1r, stream1, rep1 = _prep(x1, *c1)
    x2r, stream2, rep2 = _prep(x2, *c2)

    # --- row-tile selection ------------------------------------------------------
    s1 = x1r.dtype.itemsize if stream1 else 0
    s2 = x2r.dtype.itemsize if stream2 else 0
    stream_bytes_per_row = D * (s1 + s2)
    ct_size = jnp.dtype(compute_dtype).itemsize
    # double-buffered streamed inputs + (conservative) elementwise f32 temporaries
    per_row_vmem = D * (2 * s1 + 2 * s2 + ct_size + 12)
    resident_bytes = 2 * D * ((0 if stream1 else x1r.dtype.itemsize)
                              + (0 if stream2 else x2r.dtype.itemsize))
    vmem_budget = vmem_limit - resident_bytes - 2 * _MIB

    if Minner >= 128:
        lanes = 128
        tm_target = max(128, (target_step_bytes // max(stream_bytes_per_row, 1)) // 128 * 128)
        tm_budget = max(128, (vmem_budget // per_row_vmem) // 128 * 128)
        tm = min(tm_target, tm_budget, _round_up(Minner, 128))
        # Keep at least ~4 grid steps (2 per TensorCore on v7x) so the pipeline
        # overlaps and neither core idles, but never shrink a step below ~2 MiB.
        if Mo * _cdiv(Minner, tm) < 4:
            tm_cap = _round_up(_cdiv(Minner, _cdiv(4, Mo)), 128)
            floor_rows = 128
            if stream_bytes_per_row > 0:
                floor_rows = max(128, ((2 * _MIB) // stream_bytes_per_row) // 128 * 128)
            tm = min(tm, max(tm_cap, floor_rows))
    else:
        # Small problems: one (ragged) block, rounded to the dtype-native sublane
        # tile so the (tm, D) input block lowers cleanly for bf16 / int8 too.
        sub_mult = 8
        for arr, streams in ((x1r, stream1), (x2r, stream2)):
            if streams:
                sub_mult = max(sub_mult, 32 // max(arr.dtype.itemsize, 1))
        tm = _round_up(max(Minner, 1), sub_mult)
        lanes = tm
    sub_blocks = tm // lanes
    # TODO(synk): for huge D (where even a (128, D) block exceeds the VMEM budget)
    # a second 'arbitrary' grid axis over D with an output-resident f32 accumulator
    # (init/finalize via pl.when) would be needed.

    n_inner = _cdiv(Minner, tm)
    grid = (Mo, n_inner)

    def _in_spec(streams, rep):
        if streams:
            return pl.BlockSpec((1, tm, D), lambda o, i: (o, i, 0))
        return pl.BlockSpec((1, 1, D), lambda o, i, rep=rep: (o // rep, 0, 0))

    in_specs = [_in_spec(stream1, rep1), _in_spec(stream2, rep2)]
    out_specs = pl.BlockSpec((1, 1, sub_blocks, lanes), lambda o, i: (o, i, 0, 0))

    cost = pl.CostEstimate(
        flops=3 * M * D,
        transcendentals=0,
        bytes_accessed=int(x1r.size) * x1r.dtype.itemsize
        + int(x2r.size) * x2r.dtype.itemsize
        + M * jnp.dtype(out_dtype).itemsize,
    )

    out = pl.pallas_call(
        functools.partial(_euclidean_dist_kernel, compute_dtype=compute_dtype),
        out_shape=jax.ShapeDtypeStruct((Mo, n_inner, sub_blocks, lanes), out_dtype),
        grid_spec=pltpu.PrefetchScalarGridSpec(
            num_scalar_prefetch=0,
            grid=grid,
            in_specs=in_specs,
            out_specs=out_specs,
        ),
        compiler_params=pltpu.CompilerParams(
            dimension_semantics=("parallel", "parallel"),   # shard across TCs on v7x
            vmem_limit_bytes=int(vmem_limit),
        ),
        cost_estimate=cost,
    )(x1r, x2r)

    # Rows past Minner in the ragged last inner block are junk and dropped here.
    return out.reshape(Mo, -1)[:, :Minner].reshape(lead_shape)


if __name__ == "__main__":
    key = jax.random.PRNGKey(0)
    k1, k2, k3 = jax.random.split(key, 3)

    # Small shapes consistent with the module: batch=2, seq=8, hidden=32 -> (2, 8)
    x1 = jax.random.normal(k1, (2, 8, 32), dtype=jnp.float32)
    x2 = jax.random.normal(k2, (2, 8, 32), dtype=jnp.float32)

    out = jax.block_until_ready(euclidean_dist(x1, x2))
    ref = -jnp.sum((x1 - x2) ** 2, axis=-1)
    assert out.shape == ref.shape, (out.shape, ref.shape)
    assert jnp.allclose(out, ref, atol=1e-5, rtol=1e-5), "mismatch vs reference"

    # Partial broadcast path (no HBM materialization): (2, 8, 32) vs (2, 1, 32).
    x3 = jax.random.normal(k3, (2, 1, 32), dtype=jnp.float32)
    out_b = jax.block_until_ready(euclidean_dist(x1, x3))
    ref_b = -jnp.sum((x1 - x3) ** 2, axis=-1)
    assert out_b.shape == ref_b.shape, (out_b.shape, ref_b.shape)
    assert jnp.allclose(out_b, ref_b, atol=1e-5, rtol=1e-5), "broadcast mismatch"

    print("KERNEL_OK")
</pallas_src>

<mosaic_0001>
module attributes {stable_mosaic.version = 11 : i64} {
  func.func @_euclidean_dist_kernel(%arg0: i32, %arg1: i32, %arg2: memref<1x16x32xf32, #tpu.memory_space<vmem>>, %arg3: memref<1x16x32xf32, #tpu.memory_space<vmem>>, %arg4: memref<1x1x1x16xf32, #tpu.memory_space<vmem>>) attributes {dimension_semantics = [#tpu.dimension_semantics<parallel>, #tpu.dimension_semantics<parallel>], iteration_bounds = array<i64: 1, 1>, scalar_prefetch = 0 : i64, scratch_operands = 0 : i64, tpu.core_type = #tpu.core_type<tc>, window_params = [{transform_indices = @transform_0, window_bounds = array<i64: 1, 16, 32>}, {transform_indices = @transform_1, window_bounds = array<i64: 1, 16, 32>}, {transform_indices = @transform_2, window_bounds = array<i64: 1, 1, 1, 16>}]} {
    %c0 = arith.constant 0 : index
    %c0_0 = arith.constant 0 : index
    %c0_1 = arith.constant 0 : index
    %0 = vector.load %arg2[%c0, %c0_0, %c0_1] : memref<1x16x32xf32, #tpu.memory_space<vmem>>, vector<1x16x32xf32>
    %1 = vector.shape_cast %0 : vector<1x16x32xf32> to vector<16x32xf32>
    %c0_2 = arith.constant 0 : index
    %c0_3 = arith.constant 0 : index
    %c0_4 = arith.constant 0 : index
    %2 = vector.load %arg3[%c0_2, %c0_3, %c0_4] : memref<1x16x32xf32, #tpu.memory_space<vmem>>, vector<1x16x32xf32>
    %3 = vector.shape_cast %2 : vector<1x16x32xf32> to vector<16x32xf32>
    %4 = arith.subf %1, %3 : vector<16x32xf32>
    %5 = arith.mulf %4, %4 : vector<16x32xf32>
    %6 = vector.shape_cast %5 : vector<16x32xf32> to vector<1x16x32xf32>
    %cst = arith.constant dense<0.000000e+00> : vector<1x16xf32>
    %7 = vector.multi_reduction <add>, %6, %cst [2] : vector<1x16x32xf32> to vector<1x16xf32>
    %cst_5 = arith.constant 0.000000e+00 : f32
    %8 = vector.broadcast %cst_5 : f32 to vector<1x16xf32>
    %9 = arith.subf %8, %7 : vector<1x16xf32>
    %c0_6 = arith.constant 0 : index
    %c0_7 = arith.constant 0 : index
    %c0_8 = arith.constant 0 : index
    %c0_9 = arith.constant 0 : index
    %10 = vector.load %arg4[%c0_6, %c0_7, %c0_8, %c0_9] : memref<1x1x1x16xf32, #tpu.memory_space<vmem>>, vector<1x1x1x16xf32>
    %11 = vector.shape_cast %10 : vector<1x1x1x16xf32> to vector<1x16xf32>
    %12 = vector.shape_cast %9 : vector<1x16xf32> to vector<1x1x1x16xf32>
    tpu.vector_store %arg4[%c0_6, %c0_7, %c0_8, %c0_9], %12 {strides = array<i32>} : memref<1x1x1x16xf32, #tpu.memory_space<vmem>>, vector<1x1x1x16xf32>,
    return
  }
  func.func @transform_0(%arg0: i32, %arg1: i32) -> (i32, i32, i32) {
    %c0_i32 = arith.constant 0 : i32
    %c0_i32_0 = arith.constant 0 : i32
    return %arg0, %arg1, %c0_i32 : i32, i32, i32
  }
  func.func @transform_1(%arg0: i32, %arg1: i32) -> (i32, i32, i32) {
    %c0_i32 = arith.constant 0 : i32
    %c0_i32_0 = arith.constant 0 : i32
    return %arg0, %arg1, %c0_i32 : i32, i32, i32
  }
  func.func @transform_2(%arg0: i32, %arg1: i32) -> (i32, i32, i32, i32) {
    %c0_i32 = arith.constant 0 : i32
    %c0_i32_0 = arith.constant 0 : i32
    %c0_i32_1 = arith.constant 0 : i32
    return %arg0, %arg1, %c0_i32, %c0_i32_0 : i32, i32, i32, i32
  }
}

</mosaic_0001>

<llo_original>
// kernel: tpu_custom_call.1
$region0: #{tpu_custom_call.1}
  #allocation0 [shape = 'u32[]', space=smem, size = 0x4, offset = 0x4, fixed_abs, tag = 'smem constant byte address 0x4 - core index']
  #allocation1 [shape = 'u32[72,128]{1,0:T(1,128)}', space=vmem, size = 0x9000, scoped, tag = 'internal scratch']
  %s0 = inlined_call_operand.hbm [shape: f32[1,16,32], index: 0, kind: input, shape index: {}]
  %s1 = inlined_call_operand.hbm [shape: f32[1,16,32], index: 1, kind: input, shape index: {}]
  %s2 = inlined_call_operand.hbm [shape: f32[1,1,1,16], index: 2, kind: output, shape index: {}]
  %s3 = sld [smem:[#allocation0]]
  $region26: #{tpu_custom_call.1} parent=0
    _
  %s5 = ssub.s32 1, %s3
  %s6 = scalar_select 0, %s5, %s3
  $region1: #{tpu_custom_call.1} parent=0
    #allocation2 [shape = 'u8[8192]{0}', space=vmem, size = 0x2000, scoped, tag = 'input window, operand 0, single buffered']
    #allocation3 [shape = 's32[1]{0}', space=sflag, size = 0x4, scoped, tag = 'scoped memory for tpu_custom_call.1']
    #allocation4 [shape = 's32[1]{0}', space=sflag, size = 0x4, scoped, tag = 'scoped memory for tpu_custom_call.1']
    #allocation5 [shape = 'u8[8192]{0}', space=vmem, size = 0x2000, scoped, tag = 'input window, operand 1, single buffered']
    #allocation6 [shape = 's32[1]{0}', space=sflag, size = 0x4, scoped, tag = 'scoped memory for tpu_custom_call.1']
    #allocation7 [shape = 'u8[512]{0}', space=vmem, size = 0x400, scoped, tag = 'output window, operand 0, single buffered']
    %7 = vsyncpa [#allocation3], 0
    %8 = vsyncpa [#allocation6], 0
    %9 = vsyncpa [#allocation4], 0
    // Predicated region
    $region2: #{tpu_custom_call.1} parent=1 // pred_check
      _
    $region3: #{tpu_custom_call.1} parent=1 // pred_check_branch
      %11 = sbr.rel (0) target = $region5
    $region4: #{tpu_custom_call.1} parent=1 // pred_region
      %13 = vsyncadd [#allocation3], 0
      %s14 = sshll.u32 %s0, 4
      %s15 = int_to_ptr.hbm [resolvable:$true] %s14
      %s16 = sshll.u32 [#allocation2], 4
      %s17 = int_to_ptr.vmem [resolvable:$true] %s16
      %22 = dma.hbm_to_vmem [thread:$0]  %s15, 256, %s17, [#allocation3], 128, 128, 8
    $region5: #{tpu_custom_call.1} parent=1 // pred_fallthru
      _
    // Predicated region
    $region6: #{tpu_custom_call.1} parent=1 // pred_check
      _
    $region7: #{tpu_custom_call.1} parent=1 // pred_check_branch
      %24 = sbr.rel (0) target = $region9
    $region8: #{tpu_custom_call.1} parent=1 // pred_region
      %26 = vsyncadd [#allocation6], 0
      %s27 = sshll.u32 %s1, 4
      %s28 = int_to_ptr.hbm [resolvable:$true] %s27
      %s29 = sshll.u32 [#allocation5], 4
      %s30 = int_to_ptr.vmem [resolvable:$true] %s29
      %35 = dma.hbm_to_vmem [thread:$0]  %s28, 256, %s30, [#allocation6], 128, 128, 8
    $region9: #{tpu_custom_call.1} parent=1 // pred_fallthru
      _
    // Predicated region
    $region10: #{tpu_custom_call.1} parent=1 // pred_check
      _
    $region11: #{tpu_custom_call.1} parent=1 // pred_check_branch
      %37 = sbr.rel (0) target = $region13
    $region12: #{tpu_custom_call.1} parent=1 // pred_region
      %39 = dma.done [#allocation3], 256
    $region13: #{tpu_custom_call.1} parent=1 // pred_fallthru
      _
    // Predicated region
    $region14: #{tpu_custom_call.1} parent=1 // pred_check
      _
    $region15: #{tpu_custom_call.1} parent=1 // pred_check_branch
      %41 = sbr.rel (0) target = $region17
    $region16: #{tpu_custom_call.1} parent=1 // pred_region
      %43 = dma.done [#allocation6], 256
    $region17: #{tpu_custom_call.1} parent=1 // pred_fallthru
      _
    %v44 = vld [vmem:[#allocation2] sm:$0xff]
    %v45 = vld [vmem:[#allocation2 + $0x8] sm:$0xff]
    %v46 = vld [vmem:[#allocation5] sm:$0xff]
    %v47 = vld [vmem:[#allocation5 + $0x8] sm:$0xff]
    %v48 = vsub.f32 %v44, %v46
    %v49 = vsub.f32 %v45, %v47
    %v50 = vmul.f32 %v48, %v48
    %v51 = vmul.f32 %v49, %v49
    %vm52 = vcmask 261120
    %v53 = vsel %vm52, %v50, 0.0
    %54 = vadd.xlane.f32.xlu0 %v53
    %v55 = vpop.xlane.xlu0 %54
    %v56 = vsel %vm52, %v51, 0.0
    %57 = vadd.xlane.f32.xlu0 %v56
    %v58 = vpop.xlane.xlu0 %57
    %v59 = vsub.f32 0.0, %v55
    %v60 = vsub.f32 0.0, %v58
    %v63 = vlaneseq
    %v64 = vand.u32 %v63, 127
    %v65 = vperm.slane %v59, %v64
    %v66 = vadd.s32 %v64, 4294967288
    %v67 = vperm.slane %v60, %v66
    %vm68 = vcmask 130112
    %v69 = vsel %vm68, %v67, %v65
    %vm71 = vcmask 122880
    %72 = vst.msk [vmem:[#allocation7] sm:$0x1] %vm71, %v69
    // Predicated region
    $region18: #{tpu_custom_call.1} parent=1 // pred_check
      _
    $region19: #{tpu_custom_call.1} parent=1 // pred_check_branch
      %74 = sbr.rel (0) target = $region21
    $region20: #{tpu_custom_call.1} parent=1 // pred_region
      %76 = vsyncadd [#allocation4], 0
      %s78 = sshll.u32 [#allocation7], 4
      %s79 = int_to_ptr.vmem [resolvable:$true] %s78
      %s80 = sshll.u32 %s2, 4
      %s81 = int_to_ptr.hbm [resolvable:$true] %s80
      %83 = dma.vmem_to_hbm [thread:$0]  %s79, 16, %s81, [#allocation4]
    $region21: #{tpu_custom_call.1} parent=1 // pred_fallthru
      _
    // Predicated region
    $region22: #{tpu_custom_call.1} parent=1 // pred_check
      _
    $region23: #{tpu_custom_call.1} parent=1 // pred_check_branch
      %85 = sbr.rel (0) target = $region25
    $region24: #{tpu_custom_call.1} parent=1 // pred_region
      %87 = dma.done [#allocation4], 16
    $region25: #{tpu_custom_call.1} parent=1 // pred_fallthru
      _
    %88 = vsyncpa [#allocation3], 1
    %89 = vsyncpa [#allocation6], 1
    %90 = vsyncpa [#allocation4], 1

</llo_original>
